<compile_context>
chip_gen: v7x
topology: tpu7x:2x2x1
jax: 0.10.0
libtpu: 0.0.40
codegen_flags: <defaults>
</compile_context>

<pallas_src>
import functools

import jax
import jax.numpy as jnp
from jax.experimental import pallas as pl
from jax.experimental.pallas import tpu as pltpu


def _hswish(x):
    # nn.Hardswish: x * relu6(x + 3) / 6
    return x * jnp.clip(x + 3.0, 0.0, 6.0) * (1.0 / 6.0)


def cls_head_kernel(x_ref, w0_ref, b0_ref, w1_ref, ln_g_ref, ln_b_ref,
                    w2_ref, b2_ref, out_ref, *, hw_true):
    """One grid step processes a TN-row batch tile of ClsHead.

    x_ref   : (TN, Cin_p, HWp) f32   backbone 'stage_final' tile, NC(HW), zero-padded
    w0_ref  : (Cin_p, C0)      bf16  1x1 conv weight with BN scale folded in
    b0_ref  : (1, C0)          f32   folded BN shift (acts as conv bias)
    w1_ref  : (C0, C1)         bf16  first linear (no bias)
    ln_g/b  : (1, C1)          f32   LayerNorm affine
    w2_ref  : (C1, Ncls_p)     bf16  classifier weight (zero-padded to 128 lanes)
    b2_ref  : (1, Ncls_p)      f32
    out_ref : (TN, Ncls_p)     f32
    """
    tn, cin, hwp = x_ref.shape
    c0 = w0_ref.shape[1]

    # NC(HW) -> N(HW)C channels-last in VMEM (single minor-dim transpose on the
    # XLU, no per-batch unrolling, no HBM round trip), then bf16 for the MXU.
    xt = jnp.transpose(x_ref[...], (0, 2, 1)).astype(jnp.bfloat16)     # (TN, HWp, Cin)
    xf = xt.reshape(tn * hwp, cin)                                     # free reshape

    # QConvLayer(k=1) with BN folded into (w0, b0), then hswish. bf16 MXU, f32 acc.
    h = jnp.dot(xf, w0_ref[...], preferred_element_type=jnp.float32)   # (TN*HWp, C0)
    h = _hswish(h + b0_ref[...])

    # AdaptiveAvgPool2d(1) + flatten == mean over the HW positions of each row.
    # Zero-padded spatial columns contribute exactly hswish(b0) each, so subtract
    # that constant instead of masking the large intermediate.
    pool = jnp.sum(h.reshape(tn, hwp, c0), axis=1)                     # (TN, C0)
    if hwp != hw_true:
        pool = pool - (hwp - hw_true) * _hswish(b0_ref[...])
    p = pool * (1.0 / hw_true)

    # QLinearLayer(C0 -> C1, no bias) + LayerNorm + hswish.
    g = jnp.dot(p.astype(jnp.bfloat16), w1_ref[...],
                preferred_element_type=jnp.float32)                    # (TN, C1)
    mu = jnp.mean(g, axis=-1, keepdims=True)
    var = jnp.mean((g - mu) * (g - mu), axis=-1, keepdims=True)
    g = (g - mu) * jax.lax.rsqrt(var + 1e-5)
    g = _hswish(g * ln_g_ref[...] + ln_b_ref[...])

    # Dropout(eval) = identity; QLinearLayer(C1 -> n_classes, bias). Lane-dense out.
    out_ref[...] = (jnp.dot(g.astype(jnp.bfloat16), w2_ref[...],
                            preferred_element_type=jnp.float32) + b2_ref[...])


def _pick_batch_tile(n, cin_p, hwp, c0, c1, ncls_p, budget_bytes=24 * 1024 * 1024):
    """Largest batch tile (<= 8) whose per-step VMEM working set fits the budget."""
    def tile_bytes(tn):
        return (2 * tn * cin_p * hwp * 4            # double-buffered f32 x blocks
                + 2 * tn * ncls_p * 4               # double-buffered f32 out blocks
                + tn * hwp * cin_p * 2              # bf16 channels-last copy
                + tn * hwp * c0 * 4                 # f32 conv/act intermediate
                + 4 * (cin_p * c0 + c0 * c1 + c1 * ncls_p)   # resident bf16 weights
                + 16 * (c0 + 2 * c1 + ncls_p))      # small f32 vectors
    tn = max(1, min(8, n))
    while tn > 1 and tile_bytes(tn) > budget_bytes:
        tn = max(1, tn // 2)
    return tn, tile_bytes(tn)


def efficientvit_cls_forward(x_nchw, params):
    """EfficientViTCls forward: identity backbone stub + ClsHead Pallas kernel."""
    # TODO(synk): backbone not provided -> identity; x is feed_dict["stage_final"].
    n, cin, hgt, wid = x_nchw.shape
    hw = hgt * wid

    # One-time parameter prep: fold BN scale into the 1x1-conv weight, keep BN
    # shift as a bias; cast all matmul weights to bf16 (f32 accumulation).
    w0f = (params["w0"] * params["bn_scale"]).astype(jnp.bfloat16)     # (Cin, C0)
    b0 = params["bn_shift"]                                            # (1, C0)
    w1 = params["w1"].astype(jnp.bfloat16)                             # (C0, C1)
    ln_g, ln_b = params["ln_g"], params["ln_b"]                        # (1, C1)
    w2 = params["w2"]                                                  # (C1, n_cls)
    b2 = params["b2"]                                                  # (1, n_cls)

    c0, c1 = params["w1"].shape
    n_cls = w2.shape[1]

    # Zero-pad to hardware-friendly shapes:
    #   HW      -> multiple of 128 (lane-dense conv matmul; real stage_final is 7x7=49)
    #   Cin     -> multiple of 8   (sublane alignment of the x tile)
    #   classes -> multiple of 128 (lane-dense classifier output slab)
    #   batch   -> multiple of the batch tile TN
    hwp = 128 * pl.cdiv(hw, 128)
    cin_p = 8 * pl.cdiv(cin, 8)
    ncls_p = 128 * pl.cdiv(n_cls, 128)
    tn, tile_bytes = _pick_batch_tile(n, cin_p, hwp, c0, c1, ncls_p)
    n_pad = tn * pl.cdiv(n, tn)

    # Free reshape merges H,W; x stays f32 / NCHW order — the bf16 cast and the
    # channels-last layout fix both happen inside the kernel (no extra HBM pass).
    x = x_nchw.reshape(n, cin, hw)
    if (n_pad, cin_p, hwp) != (n, cin, hw):
        x = jnp.pad(x, ((0, n_pad - n), (0, cin_p - cin), (0, hwp - hw)))
    if cin_p != cin:
        w0f = jnp.pad(w0f, ((0, cin_p - cin), (0, 0)))
    w2p = jnp.pad(w2, ((0, 0), (0, ncls_p - n_cls))).astype(jnp.bfloat16)
    b2p = jnp.pad(b2, ((0, 0), (0, ncls_p - n_cls)))

    flops = 2 * n_pad * (hwp * cin_p * c0 + c0 * c1 + c1 * ncls_p)
    bytes_accessed = (x.size * 4 + 2 * (w0f.size + w1.size + w2p.size)
                      + 4 * (b0.size + ln_g.size + ln_b.size + b2p.size)
                      + 4 * n_pad * ncls_p)

    kernel = functools.partial(cls_head_kernel, hw_true=hw)
    out = pl.pallas_call(
        kernel,
        out_shape=jax.ShapeDtypeStruct((n_pad, ncls_p), jnp.float32),
        grid_spec=pltpu.PrefetchScalarGridSpec(
            num_scalar_prefetch=0,
            grid=(n_pad // tn,),
            in_specs=[
                # batch-tiled input: double-buffered, DMA overlaps compute
                pl.BlockSpec((tn, cin_p, hwp), lambda i: (i, 0, 0)),
                # weights: whole-array blocks with constant index_map -> loaded
                # once and kept resident across the batch grid
                pl.BlockSpec((cin_p, c0), lambda i: (0, 0)),
                pl.BlockSpec((1, c0), lambda i: (0, 0)),
                pl.BlockSpec((c0, c1), lambda i: (0, 0)),
                pl.BlockSpec((1, c1), lambda i: (0, 0)),
                pl.BlockSpec((1, c1), lambda i: (0, 0)),
                pl.BlockSpec((c1, ncls_p), lambda i: (0, 0)),
                pl.BlockSpec((1, ncls_p), lambda i: (0, 0)),
            ],
            out_specs=pl.BlockSpec((tn, ncls_p), lambda i: (i, 0)),
        ),
        compiler_params=pltpu.CompilerParams(
            # independent batch tiles -> sharded across TensorCores on v7x
            dimension_semantics=("parallel",),
            # above the 16/32 MiB default scoped limits, below v7x's 64 MiB physical
            vmem_limit_bytes=int(min(max(2 * tile_bytes, 32 * 1024 * 1024),
                                     56 * 1024 * 1024)),
        ),
        cost_estimate=pl.CostEstimate(flops=flops, transcendentals=0,
                                      bytes_accessed=bytes_accessed),
    )(x, w0f, b0, w1, ln_g, ln_b, w2p, b2p)

    return out[:n, :n_cls]


def make_params(key, in_channels, width_list, n_classes):
    """Deterministic synthetic parameters matching ClsHead's shapes."""
    c0, c1 = width_list
    ks = jax.random.split(key, 10)
    # QConvLayer: conv weight (c0, in_channels, 1, 1) -> stored transposed (Cin, c0)
    conv_w = 0.05 * jax.random.normal(ks[0], (in_channels, c0), jnp.float32)
    # BatchNorm2d (eval): gamma, beta, running_mean, running_var -> folded
    bn_gamma = 1.0 + 0.1 * jax.random.normal(ks[1], (c0,), jnp.float32)
    bn_beta = 0.1 * jax.random.normal(ks[2], (c0,), jnp.float32)
    bn_mean = 0.1 * jax.random.normal(ks[3], (c0,), jnp.float32)
    bn_var = jax.random.uniform(ks[4], (c0,), jnp.float32, 0.5, 1.5)
    eps = 1e-5
    bn_scale = bn_gamma / jnp.sqrt(bn_var + eps)
    bn_shift = bn_beta - bn_mean * bn_scale
    # QLinearLayer(c0 -> c1, no bias) + LayerNorm(c1)
    w1 = 0.05 * jax.random.normal(ks[5], (c0, c1), jnp.float32)
    ln_g = 1.0 + 0.1 * jax.random.normal(ks[6], (c1,), jnp.float32)
    ln_b = 0.1 * jax.random.normal(ks[7], (c1,), jnp.float32)
    # QLinearLayer(c1 -> n_classes, bias=True)
    w2 = 0.05 * jax.random.normal(ks[8], (c1, n_classes), jnp.float32)
    b2 = 0.1 * jax.random.normal(ks[9], (n_classes,), jnp.float32)
    return {
        "w0": conv_w,
        "bn_scale": bn_scale.reshape(1, c0),
        "bn_shift": bn_shift.reshape(1, c0),
        "w1": w1,
        "ln_g": ln_g.reshape(1, c1),
        "ln_b": ln_b.reshape(1, c1),
        "w2": w2,
        "b2": b2.reshape(1, n_classes),
    }


def reference_forward(x_nchw, prm):
    """Pure-JAX reference of the same ClsHead forward (eval mode), using the
    same bf16-operand / f32-accumulation precision choices as the kernel."""
    n, cin, hgt, wid = x_nchw.shape
    hw = hgt * wid
    w0f = (prm["w0"] * prm["bn_scale"]).astype(jnp.bfloat16)
    x = jnp.transpose(x_nchw, (0, 2, 3, 1)).reshape(n, hw, cin).astype(jnp.bfloat16)
    h = jnp.einsum("nsc,cd->nsd", x, w0f, preferred_element_type=jnp.float32)
    h = _hswish(h + prm["bn_shift"])
    p = jnp.mean(h, axis=1)                          # AdaptiveAvgPool2d(1) + flatten
    g = jnp.dot(p.astype(jnp.bfloat16), prm["w1"].astype(jnp.bfloat16),
                preferred_element_type=jnp.float32)
    mu = g.mean(-1, keepdims=True)
    var = ((g - mu) ** 2).mean(-1, keepdims=True)
    g = (g - mu) * jax.lax.rsqrt(var + 1e-5)
    g = _hswish(g * prm["ln_g"] + prm["ln_b"])
    return (jnp.dot(g.astype(jnp.bfloat16), prm["w2"].astype(jnp.bfloat16),
                    preferred_element_type=jnp.float32) + prm["b2"])


if __name__ == "__main__":
    # Small synthetic shapes consistent with the head; the 7x7 spatial size
    # matches the real stage_final resolution and exercises the HW-padding path.
    #   backbone "stage_final" feature: (N=2, Cin=16, H=7, W=7)
    #   ClsHead(width_list=[32, 64], n_classes=10)
    N, Cin, H, W = 2, 16, 7, 7
    width_list = [32, 64]
    n_classes = 10

    key = jax.random.PRNGKey(0)
    kx, kp = jax.random.split(key)
    x = jax.random.normal(kx, (N, Cin, H, W), jnp.float32)
    params = make_params(kp, Cin, width_list, n_classes)

    fwd = jax.jit(efficientvit_cls_forward)
    out = jax.block_until_ready(fwd(x, params))

    ref = reference_forward(x, params)
    assert out.shape == (N, n_classes), out.shape
    err = jnp.max(jnp.abs(out - ref))
    assert jnp.allclose(out, ref, atol=3e-3, rtol=3e-3), f"max abs err = {err}"

    print("KERNEL_OK")
</pallas_src>

<mosaic_0001>
module attributes {stable_mosaic.version = 11 : i64} {
  func.func @cls_head_kernel(%arg0: i32, %arg1: memref<2x16x128xf32, #tpu.memory_space<vmem>>, %arg2: memref<16x32xbf16, #tpu.memory_space<vmem>>, %arg3: memref<1x32xf32, #tpu.memory_space<vmem>>, %arg4: memref<32x64xbf16, #tpu.memory_space<vmem>>, %arg5: memref<1x64xf32, #tpu.memory_space<vmem>>, %arg6: memref<1x64xf32, #tpu.memory_space<vmem>>, %arg7: memref<64x128xbf16, #tpu.memory_space<vmem>>, %arg8: memref<1x128xf32, #tpu.memory_space<vmem>>, %arg9: memref<2x128xf32, #tpu.memory_space<vmem>>) attributes {dimension_semantics = [#tpu.dimension_semantics<parallel>], iteration_bounds = array<i64: 1>, scalar_prefetch = 0 : i64, scratch_operands = 0 : i64, tpu.core_type = #tpu.core_type<tc>, window_params = [{transform_indices = @transform_0, window_bounds = array<i64: 2, 16, 128>}, {pipeline_mode = #tpu.pipeline_mode<synchronous>, transform_indices = @transform_1, window_bounds = array<i64: 16, 32>}, {pipeline_mode = #tpu.pipeline_mode<synchronous>, transform_indices = @transform_2, window_bounds = array<i64: 1, 32>}, {pipeline_mode = #tpu.pipeline_mode<synchronous>, transform_indices = @transform_3, window_bounds = array<i64: 32, 64>}, {pipeline_mode = #tpu.pipeline_mode<synchronous>, transform_indices = @transform_4, window_bounds = array<i64: 1, 64>}, {pipeline_mode = #tpu.pipeline_mode<synchronous>, transform_indices = @transform_5, window_bounds = array<i64: 1, 64>}, {pipeline_mode = #tpu.pipeline_mode<synchronous>, transform_indices = @transform_6, window_bounds = array<i64: 64, 128>}, {pipeline_mode = #tpu.pipeline_mode<synchronous>, transform_indices = @transform_7, window_bounds = array<i64: 1, 128>}, {transform_indices = @transform_8, window_bounds = array<i64: 2, 128>}]} {
    %c0 = arith.constant 0 : index
    %c0_0 = arith.constant 0 : index
    %c0_1 = arith.constant 0 : index
    %0 = vector.load %arg1[%c0, %c0_0, %c0_1] : memref<2x16x128xf32, #tpu.memory_space<vmem>>, vector<2x16x128xf32>
    %1 = tpu.transpose %0, [0, 2, 1] : vector<2x16x128xf32> -> vector<2x128x16xf32>
    %2 = arith.truncf %1 : vector<2x128x16xf32> to vector<2x128x16xbf16>
    %3 = vector.shape_cast %2 : vector<2x128x16xbf16> to vector<256x16xbf16>
    %c0_2 = arith.constant 0 : index
    %c0_3 = arith.constant 0 : index
    %4 = vector.load %arg2[%c0_2, %c0_3] : memref<16x32xbf16, #tpu.memory_space<vmem>>, vector<16x32xbf16>
    %cst = arith.constant dense<0.000000e+00> : vector<256x32xf32>
    %5 = tpu.matmul %3, %4, %cst {dimension_numbers = #tpu.dot_dimension_numbers<[1], [0], [0], [1], [0, 0, 1, 1], [], []>} : vector<256x16xbf16>, vector<16x32xbf16>, vector<256x32xf32> -> vector<256x32xf32>
    %c0_4 = arith.constant 0 : index
    %c0_5 = arith.constant 0 : index
    %6 = vector.load %arg3[%c0_4, %c0_5] : memref<1x32xf32, #tpu.memory_space<vmem>>, vector<1x32xf32>
    %7 = vector.broadcast %6 : vector<1x32xf32> to vector<256x32xf32>
    %8 = arith.addf %5, %7 : vector<256x32xf32>
    %cst_6 = arith.constant 3.000000e+00 : f32
    %9 = vector.broadcast %cst_6 : f32 to vector<256x32xf32>
    %10 = arith.addf %8, %9 : vector<256x32xf32>
    %cst_7 = arith.constant 0.000000e+00 : f32
    %cst_8 = arith.constant 6.000000e+00 : f32
    %11 = vector.broadcast %cst_7 : f32 to vector<256x32xf32>
    %12 = arith.maximumf %11, %10 : vector<256x32xf32>
    %13 = vector.broadcast %cst_8 : f32 to vector<256x32xf32>
    %14 = arith.minimumf %13, %12 : vector<256x32xf32>
    %15 = arith.mulf %8, %14 : vector<256x32xf32>
    %cst_9 = arith.constant 0.166666672 : f32
    %16 = vector.broadcast %cst_9 : f32 to vector<256x32xf32>
    %17 = arith.mulf %15, %16 : vector<256x32xf32>
    %18 = vector.shape_cast %17 : vector<256x32xf32> to vector<2x128x32xf32>
    %cst_10 = arith.constant dense<0.000000e+00> : vector<2x32xf32>
    %19 = vector.multi_reduction <add>, %18, %cst_10 [1] : vector<2x128x32xf32> to vector<2x32xf32>
    %c0_11 = arith.constant 0 : index
    %c0_12 = arith.constant 0 : index
    %20 = vector.load %arg3[%c0_11, %c0_12] : memref<1x32xf32, #tpu.memory_space<vmem>>, vector<1x32xf32>
    %cst_13 = arith.constant 3.000000e+00 : f32
    %21 = vector.broadcast %cst_13 : f32 to vector<1x32xf32>
    %22 = arith.addf %20, %21 : vector<1x32xf32>
    %cst_14 = arith.constant 0.000000e+00 : f32
    %cst_15 = arith.constant 6.000000e+00 : f32
    %23 = vector.broadcast %cst_14 : f32 to vector<1x32xf32>
    %24 = arith.maximumf %23, %22 : vector<1x32xf32>
    %25 = vector.broadcast %cst_15 : f32 to vector<1x32xf32>
    %26 = arith.minimumf %25, %24 : vector<1x32xf32>
    %27 = arith.mulf %20, %26 : vector<1x32xf32>
    %cst_16 = arith.constant 0.166666672 : f32
    %28 = vector.broadcast %cst_16 : f32 to vector<1x32xf32>
    %29 = arith.mulf %27, %28 : vector<1x32xf32>
    %cst_17 = arith.constant 7.900000e+01 : f32
    %30 = vector.broadcast %cst_17 : f32 to vector<1x32xf32>
    %31 = arith.mulf %30, %29 : vector<1x32xf32>
    %32 = vector.broadcast %31 : vector<1x32xf32> to vector<2x32xf32>
    %33 = arith.subf %19, %32 : vector<2x32xf32>
    %cst_18 = arith.constant 0.0204081628 : f32
    %34 = vector.broadcast %cst_18 : f32 to vector<2x32xf32>
    %35 = arith.mulf %33, %34 : vector<2x32xf32>
    %36 = arith.truncf %35 : vector<2x32xf32> to vector<2x32xbf16>
    %c0_19 = arith.constant 0 : index
    %c0_20 = arith.constant 0 : index
    %37 = vector.load %arg4[%c0_19, %c0_20] : memref<32x64xbf16, #tpu.memory_space<vmem>>, vector<32x64xbf16>
    %cst_21 = arith.constant dense<0.000000e+00> : vector<2x64xf32>
    %38 = tpu.matmul %36, %37, %cst_21 {dimension_numbers = #tpu.dot_dimension_numbers<[1], [0], [0], [1], [0, 0, 1, 1], [], []>} : vector<2x32xbf16>, vector<32x64xbf16>, vector<2x64xf32> -> vector<2x64xf32>
    %cst_22 = arith.constant dense<0.000000e+00> : vector<2xf32>
    %39 = vector.multi_reduction <add>, %38, %cst_22 [1] : vector<2x64xf32> to vector<2xf32>
    %40 = vector.shape_cast %39 : vector<2xf32> to vector<2x1xf32>
    %cst_23 = arith.constant 6.400000e+01 : f32
    %41 = vector.broadcast %cst_23 : f32 to vector<2x1xf32>
    %42 = arith.divf %40, %41 : vector<2x1xf32>
    %43 = vector.broadcast %42 : vector<2x1xf32> to vector<2x64xf32>
    %44 = arith.subf %38, %43 : vector<2x64xf32>
    %45 = vector.broadcast %42 : vector<2x1xf32> to vector<2x64xf32>
    %46 = arith.subf %38, %45 : vector<2x64xf32>
    %47 = arith.mulf %44, %46 : vector<2x64xf32>
    %cst_24 = arith.constant dense<0.000000e+00> : vector<2xf32>
    %48 = vector.multi_reduction <add>, %47, %cst_24 [1] : vector<2x64xf32> to vector<2xf32>
    %49 = vector.shape_cast %48 : vector<2xf32> to vector<2x1xf32>
    %cst_25 = arith.constant 6.400000e+01 : f32
    %50 = vector.broadcast %cst_25 : f32 to vector<2x1xf32>
    %51 = arith.divf %49, %50 : vector<2x1xf32>
    %52 = vector.broadcast %42 : vector<2x1xf32> to vector<2x64xf32>
    %53 = arith.subf %38, %52 : vector<2x64xf32>
    %cst_26 = arith.constant 9.99999974E-6 : f32
    %54 = vector.broadcast %cst_26 : f32 to vector<2x1xf32>
    %55 = arith.addf %51, %54 : vector<2x1xf32>
    %56 = math.rsqrt %55 : vector<2x1xf32>
    %57 = vector.broadcast %56 : vector<2x1xf32> to vector<2x64xf32>
    %58 = arith.mulf %53, %57 : vector<2x64xf32>
    %c0_27 = arith.constant 0 : index
    %c0_28 = arith.constant 0 : index
    %59 = vector.load %arg5[%c0_27, %c0_28] : memref<1x64xf32, #tpu.memory_space<vmem>>, vector<1x64xf32>
    %60 = vector.broadcast %59 : vector<1x64xf32> to vector<2x64xf32>
    %61 = arith.mulf %58, %60 : vector<2x64xf32>
    %c0_29 = arith.constant 0 : index
    %c0_30 = arith.constant 0 : index
    %62 = vector.load %arg6[%c0_29, %c0_30] : memref<1x64xf32, #tpu.memory_space<vmem>>, vector<1x64xf32>
    %63 = vector.broadcast %62 : vector<1x64xf32> to vector<2x64xf32>
    %64 = arith.addf %61, %63 : vector<2x64xf32>
    %cst_31 = arith.constant 3.000000e+00 : f32
    %65 = vector.broadcast %cst_31 : f32 to vector<2x64xf32>
    %66 = arith.addf %64, %65 : vector<2x64xf32>
    %cst_32 = arith.constant 0.000000e+00 : f32
    %cst_33 = arith.constant 6.000000e+00 : f32
    %67 = vector.broadcast %cst_32 : f32 to vector<2x64xf32>
    %68 = arith.maximumf %67, %66 : vector<2x64xf32>
    %69 = vector.broadcast %cst_33 : f32 to vector<2x64xf32>
    %70 = arith.minimumf %69, %68 : vector<2x64xf32>
    %71 = arith.mulf %64, %70 : vector<2x64xf32>
    %cst_34 = arith.constant 0.166666672 : f32
    %72 = vector.broadcast %cst_34 : f32 to vector<2x64xf32>
    %73 = arith.mulf %71, %72 : vector<2x64xf32>
    %74 = arith.truncf %73 : vector<2x64xf32> to vector<2x64xbf16>
    %c0_35 = arith.constant 0 : index
    %c0_36 = arith.constant 0 : index
    %75 = vector.load %arg7[%c0_35, %c0_36] : memref<64x128xbf16, #tpu.memory_space<vmem>>, vector<64x128xbf16>
    %cst_37 = arith.constant dense<0.000000e+00> : vector<2x128xf32>
    %76 = tpu.matmul %74, %75, %cst_37 {dimension_numbers = #tpu.dot_dimension_numbers<[1], [0], [0], [1], [0, 0, 1, 1], [], []>} : vector<2x64xbf16>, vector<64x128xbf16>, vector<2x128xf32> -> vector<2x128xf32>
    %c0_38 = arith.constant 0 : index
    %c0_39 = arith.constant 0 : index
    %77 = vector.load %arg8[%c0_38, %c0_39] : memref<1x128xf32, #tpu.memory_space<vmem>>, vector<1x128xf32>
    %78 = vector.broadcast %77 : vector<1x128xf32> to vector<2x128xf32>
    %79 = arith.addf %76, %78 : vector<2x128xf32>
    %c0_40 = arith.constant 0 : index
    %c0_41 = arith.constant 0 : index
    %80 = vector.load %arg9[%c0_40, %c0_41] : memref<2x128xf32, #tpu.memory_space<vmem>>, vector<2x128xf32>
    tpu.vector_store %arg9[%c0_40, %c0_41], %79 {strides = array<i32>} : memref<2x128xf32, #tpu.memory_space<vmem>>, vector<2x128xf32>,
    return
  }
  func.func @transform_0(%arg0: i32) -> (i32, i32, i32) {
    %c0_i32 = arith.constant 0 : i32
    %c0_i32_0 = arith.constant 0 : i32
    %c0_i32_1 = arith.constant 0 : i32
    return %arg0, %c0_i32, %c0_i32_0 : i32, i32, i32
  }
  func.func @transform_1(%arg0: i32) -> (i32, i32) {
    %c0_i32 = arith.constant 0 : i32
    %c0_i32_0 = arith.constant 0 : i32
    %c0_i32_1 = arith.constant 0 : i32
    return %c0_i32, %c0_i32_0 : i32, i32
  }
  func.func @transform_2(%arg0: i32) -> (i32, i32) {
    %c0_i32 = arith.constant 0 : i32
    %c0_i32_0 = arith.constant 0 : i32
    %c0_i32_1 = arith.constant 0 : i32
    return %c0_i32, %c0_i32_0 : i32, i32
  }
  func.func @transform_3(%arg0: i32) -> (i32, i32) {
    %c0_i32 = arith.constant 0 : i32
    %c0_i32_0 = arith.constant 0 : i32
    %c0_i32_1 = arith.constant 0 : i32
    return %c0_i32, %c0_i32_0 : i32, i32
  }
  func.func @transform_4(%arg0: i32) -> (i32, i32) {
    %c0_i32 = arith.constant 0 : i32
    %c0_i32_0 = arith.constant 0 : i32
    %c0_i32_1 = arith.constant 0 : i32
    return %c0_i32, %c0_i32_0 : i32, i32
  }
  func.func @transform_5(%arg0: i32) -> (i32, i32) {
    %c0_i32 = arith.constant 0 : i32
    %c0_i32_0 = arith.constant 0 : i32
    %c0_i32_1 = arith.constant 0 : i32
    return %c0_i32, %c0_i32_0 : i32, i32
  }
  func.func @transform_6(%arg0: i32) -> (i32, i32) {
    %c0_i32 = arith.constant 0 : i32
    %c0_i32_0 = arith.constant 0 : i32
    %c0_i32_1 = arith.constant 0 : i32
    return %c0_i32, %c0_i32_0 : i32, i32
  }
  func.func @transform_7(%arg0: i32) -> (i32, i32) {
    %c0_i32 = arith.constant 0 : i32
    %c0_i32_0 = arith.constant 0 : i32
    %c0_i32_1 = arith.constant 0 : i32
    return %c0_i32, %c0_i32_0 : i32, i32
  }
  func.func @transform_8(%arg0: i32) -> (i32, i32) {
    %c0_i32 = arith.constant 0 : i32
    %c0_i32_0 = arith.constant 0 : i32
    return %arg0, %c0_i32 : i32, i32
  }
}

</mosaic_0001>

<llo_original>
// kernel: efficientvit_cls_forward.1
$region0: #{efficientvit_cls_forward.1}
  #allocation0 [shape = 'u32[]', space=smem, size = 0x4, offset = 0x4, fixed_abs, tag = 'smem constant byte address 0x4 - core index']
  #allocation1 [shape = 'u32[144,128]{1,0:T(1,128)}', space=vmem, size = 0x12000, scoped, tag = 'internal scratch']
  %s0 = inlined_call_operand.vmem [shape: f32[2,16,128], index: 0, kind: input, shape index: {}]
  %s1 = inlined_call_operand.vmem [shape: bf16[16,32], index: 1, kind: input, shape index: {}]
  %s2 = inlined_call_operand.vmem [shape: f32[1,32], index: 2, kind: input, shape index: {}]
  %s3 = inlined_call_operand.vmem [shape: bf16[32,64], index: 3, kind: input, shape index: {}]
  %s4 = inlined_call_operand.vmem [shape: f32[1,64], index: 4, kind: input, shape index: {}]
  %s5 = inlined_call_operand.vmem [shape: f32[1,64], index: 5, kind: input, shape index: {}]
  %s6 = inlined_call_operand.vmem [shape: bf16[64,128], index: 6, kind: input, shape index: {}]
  %s7 = inlined_call_operand.vmem [shape: f32[1,128], index: 7, kind: input, shape index: {}]
  %s8 = inlined_call_operand.hbm [shape: f32[2,128], index: 8, kind: output, shape index: {}]
  %s9 = sld [smem:[#allocation0]]
  $region42: #{efficientvit_cls_forward.1} parent=0
    _
  %s11 = ssub.s32 1, %s9
  %s12 = scalar_select 0, %s11, %s9
  $region1: #{efficientvit_cls_forward.1} parent=0
    #allocation2 [shape = 'u8[1024]{0}', space=vmem, size = 0x400, scoped, tag = 'output window, operand 0, single buffered']
    #allocation3 [shape = 's32[1]{0}', space=sflag, size = 0x4, scoped, tag = 'scoped memory for efficientvit_cls_forward.1']
    %13 = vsyncpa [#allocation3], 0
    // Predicated region
    $region2: #{efficientvit_cls_forward.1} parent=1 // pred_check
      _
    $region3: #{efficientvit_cls_forward.1} parent=1 // pred_check_branch
      %15 = sbr.rel (0) target = $region5
    $region4: #{efficientvit_cls_forward.1} parent=1 // pred_region
      _
    $region5: #{efficientvit_cls_forward.1} parent=1 // pred_fallthru
      _
    // Predicated region
    $region6: #{efficientvit_cls_forward.1} parent=1 // pred_check
      _
    $region7: #{efficientvit_cls_forward.1} parent=1 // pred_check_branch
      %17 = sbr.rel (0) target = $region9
    $region8: #{efficientvit_cls_forward.1} parent=1 // pred_region
      _
    $region9: #{efficientvit_cls_forward.1} parent=1 // pred_fallthru
      _
    // Predicated region
    $region10: #{efficientvit_cls_forward.1} parent=1 // pred_check
      _
    $region11: #{efficientvit_cls_forward.1} parent=1 // pred_check_branch
      %19 = sbr.rel (0) target = $region13
    $region12: #{efficientvit_cls_forward.1} parent=1 // pred_region
      _
    $region13: #{efficientvit_cls_forward.1} parent=1 // pred_fallthru
      _
    // Predicated region
    $region14: #{efficientvit_cls_forward.1} parent=1 // pred_check
      _
    $region15: #{efficientvit_cls_forward.1} parent=1 // pred_check_branch
      %21 = sbr.rel (0) target = $region17
    $region16: #{efficientvit_cls_forward.1} parent=1 // pred_region
      _
    $region17: #{efficientvit_cls_forward.1} parent=1 // pred_fallthru
      _
    // Predicated region
    $region18: #{efficientvit_cls_forward.1} parent=1 // pred_check
      _
    $region19: #{efficientvit_cls_forward.1} parent=1 // pred_check_branch
      %23 = sbr.rel (0) target = $region21
    $region20: #{efficientvit_cls_forward.1} parent=1 // pred_region
      _
    $region21: #{efficientvit_cls_forward.1} parent=1 // pred_fallthru
      _
    // Predicated region
    $region22: #{efficientvit_cls_forward.1} parent=1 // pred_check
      _
    $region23: #{efficientvit_cls_forward.1} parent=1 // pred_check_branch
      %25 = sbr.rel (0) target = $region25
    $region24: #{efficientvit_cls_forward.1} parent=1 // pred_region
      _
    $region25: #{efficientvit_cls_forward.1} parent=1 // pred_fallthru
      _
    // Predicated region
    $region26: #{efficientvit_cls_forward.1} parent=1 // pred_check
      _
    $region27: #{efficientvit_cls_forward.1} parent=1 // pred_check_branch
      %27 = sbr.rel (0) target = $region29
    $region28: #{efficientvit_cls_forward.1} parent=1 // pred_region
      _
    $region29: #{efficientvit_cls_forward.1} parent=1 // pred_fallthru
      _
    // Predicated region
    $region30: #{efficientvit_cls_forward.1} parent=1 // pred_check
      _
    $region31: #{efficientvit_cls_forward.1} parent=1 // pred_check_branch
      %29 = sbr.rel (0) target = $region33
    $region32: #{efficientvit_cls_forward.1} parent=1 // pred_region
      _
    $region33: #{efficientvit_cls_forward.1} parent=1 // pred_fallthru
      _
    %v31 = vld [vmem:[%s0] sm:$0xff]
    %v32 = vld [vmem:[%s0 + $0x8] sm:$0xff]
    %v33 = vld [vmem:[%s0 + $0x10] sm:$0xff]
    %v34 = vld [vmem:[%s0 + $0x18] sm:$0xff]
    %35 = vxpose.xlu0.b32.start [1/16] %v31, 128
    %36 = vxpose.xlu0.b32.cont [2/16] %v32, 128
    %37 = vxpose.xlu0.b32.cont [3/16] 0.0, 128
    %38 = vxpose.xlu0.b32.cont [4/16] 0.0, 128
    %39 = vxpose.xlu0.b32.cont [5/16] 0.0, 128
    %40 = vxpose.xlu0.b32.cont [6/16] 0.0, 128
    %41 = vxpose.xlu0.b32.cont [7/16] 0.0, 128
    %42 = vxpose.xlu0.b32.cont [8/16] 0.0, 128
    %43 = vxpose.xlu0.b32.cont [9/16] 0.0, 128
    %44 = vxpose.xlu0.b32.cont [10/16] 0.0, 128
    %45 = vxpose.xlu0.b32.cont [11/16] 0.0, 128
    %46 = vxpose.xlu0.b32.cont [12/16] 0.0, 128
    %47 = vxpose.xlu0.b32.cont [13/16] 0.0, 128
    %48 = vxpose.xlu0.b32.cont [14/16] 0.0, 128
    %49 = vxpose.xlu0.b32.cont [15/16] 0.0, 128
    %50 = vxpose.xlu0.b32.end [16/16] 0.0, 128
    %v51 = vpop.trf.xlu0
    %v52 = vpop.trf.xlu0
    %v53 = vpop.trf.xlu0
    %v54 = vpop.trf.xlu0
    %v55 = vpop.trf.xlu0
    %v56 = vpop.trf.xlu0
    %v57 = vpop.trf.xlu0
    %v58 = vpop.trf.xlu0
    %v59 = vpop.trf.xlu0
    %v60 = vpop.trf.xlu0
    %v61 = vpop.trf.xlu0
    %v62 = vpop.trf.xlu0
    %v63 = vpop.trf.xlu0
    %v64 = vpop.trf.xlu0
    %v65 = vpop.trf.xlu0
    %v66 = vpop.trf.xlu0
    %67 = vxpose.xlu0.b32.start [1/16] %v33, 128
    %68 = vxpose.xlu0.b32.cont [2/16] %v34, 128
    %69 = vxpose.xlu0.b32.cont [3/16] 0.0, 128
    %70 = vxpose.xlu0.b32.cont [4/16] 0.0, 128
    %71 = vxpose.xlu0.b32.cont [5/16] 0.0, 128
    %72 = vxpose.xlu0.b32.cont [6/16] 0.0, 128
    %73 = vxpose.xlu0.b32.cont [7/16] 0.0, 128
    %74 = vxpose.xlu0.b32.cont [8/16] 0.0, 128
    %75 = vxpose.xlu0.b32.cont [9/16] 0.0, 128
    %76 = vxpose.xlu0.b32.cont [10/16] 0.0, 128
    %77 = vxpose.xlu0.b32.cont [11/16] 0.0, 128
    %78 = vxpose.xlu0.b32.cont [12/16] 0.0, 128
    %79 = vxpose.xlu0.b32.cont [13/16] 0.0, 128
    %80 = vxpose.xlu0.b32.cont [14/16] 0.0, 128
    %81 = vxpose.xlu0.b32.cont [15/16] 0.0, 128
    %82 = vxpose.xlu0.b32.end [16/16] 0.0, 128
    %v83 = vpop.trf.xlu0
    %v84 = vpop.trf.xlu0
    %v85 = vpop.trf.xlu0
    %v86 = vpop.trf.xlu0
    %v87 = vpop.trf.xlu0
    %v88 = vpop.trf.xlu0
    %v89 = vpop.trf.xlu0
    %v90 = vpop.trf.xlu0
    %v91 = vpop.trf.xlu0
    %v92 = vpop.trf.xlu0
    %v93 = vpop.trf.xlu0
    %v94 = vpop.trf.xlu0
    %v95 = vpop.trf.xlu0
    %v96 = vpop.trf.xlu0
    %v97 = vpop.trf.xlu0
    %v98 = vpop.trf.xlu0
    %v99 = vpack.c.bf16 %v52, %v51
    %v100 = vpack.c.bf16 %v54, %v53
    %v101 = vpack.c.bf16 %v56, %v55
    %v102 = vpack.c.bf16 %v58, %v57
    %v103 = vpack.c.bf16 %v60, %v59
    %v104 = vpack.c.bf16 %v62, %v61
    %v105 = vpack.c.bf16 %v64, %v63
    %v106 = vpack.c.bf16 %v66, %v65
    %v107 = vpack.c.bf16 %v84, %v83
    %v108 = vpack.c.bf16 %v86, %v85
    %v109 = vpack.c.bf16 %v88, %v87
    %v110 = vpack.c.bf16 %v90, %v89
    %v111 = vpack.c.bf16 %v92, %v91
    %v112 = vpack.c.bf16 %v94, %v93
    %v113 = vpack.c.bf16 %v96, %v95
    %v114 = vpack.c.bf16 %v98, %v97
    %v115 = vld [vmem:[%s1] sm:$0xf]
    %v116 = vld [vmem:[%s1 + $0x4] sm:$0xf]
    %v117 = vld [vmem:[%s2] sm:$0x1]
    %v119 = vlaneseq
    %v120 = vshrl.u32 %v119, 7
    %v121 = vsub.s32 0, %v120
    %v122 = vrot.slane %v117, %v121
    %v126 = vunpack.c.l.b16 %v115
    %v127 = vunpack.c.l.b16 %v116
    %v128 = vpack.c.b16 %v127, %v126
    %vm130 = vcmask 130048
    %v132 = vsel %vm130, %v99, 0
    %v135 = vsel %vm130, %v100, 0
    %v138 = vsel %vm130, %v101, 0
    %v141 = vsel %vm130, %v102, 0
    %v144 = vsel %vm130, %v103, 0
    %v147 = vsel %vm130, %v104, 0
    %v150 = vsel %vm130, %v105, 0
    %v153 = vsel %vm130, %v106, 0
    %v156 = vsel %vm130, %v107, 0
    %v159 = vsel %vm130, %v108, 0
    %v162 = vsel %vm130, %v109, 0
    %v165 = vsel %vm130, %v110, 0
    %v168 = vsel %vm130, %v111, 0
    %v171 = vsel %vm130, %v112, 0
    %v174 = vsel %vm130, %v113, 0
    %v177 = vsel %vm130, %v114, 0
    %179 = vmatprep.subr.bf16.mxu0 0
    %180 = vmatpush1.bf16.msra.mxu0 %v128
    %181 = vmatprep.subr.bf16.mxu0 0
    %182 = vmatpush1.bf16.msra.mxu0 0
    %183 = vmatprep.subr.bf16.mxu0 0
    %184 = vmatpush1.bf16.msra.mxu0 0
    %185 = vmatprep.subr.bf16.mxu0 0
    %186 = vmatpush1.bf16.msra.mxu0 0
    %187 = vmatprep.subr.bf16.mxu0 0
    %188 = vmatpush1.bf16.msra.mxu0 0
    %189 = vmatprep.subr.bf16.mxu0 0
    %190 = vmatpush1.bf16.msra.mxu0 0
    %191 = vmatprep.subr.bf16.mxu0 0
    %192 = vmatpush1.bf16.msra.mxu0 0
    %193 = vmatprep.subr.bf16.mxu0 0
    %194 = vmatpush1.bf16.msra.mxu0 0
    %195 = vmatprep.subr.bf16.mxu0 0
    %196 = vmatpush1.bf16.msra.mxu0 0
    %197 = vmatprep.subr.bf16.mxu0 0
    %198 = vmatpush1.bf16.msra.mxu0 0
    %199 = vmatprep.subr.bf16.mxu0 0
    %200 = vmatpush1.bf16.msra.mxu0 0
    %201 = vmatprep.subr.bf16.mxu0 0
    %202 = vmatpush1.bf16.msra.mxu0 0
    %203 = vmatprep.subr.bf16.mxu0 0
    %204 = vmatpush1.bf16.msra.mxu0 0
    %205 = vmatprep.subr.bf16.mxu0 0
    %206 = vmatpush1.bf16.msra.mxu0 0
    %207 = vmatprep.subr.bf16.mxu0 0
    %208 = vmatpush1.bf16.msra.mxu0 0
    %209 = vmatprep.subr.bf16.mxu0 0
    %210 = vmatpush1.bf16.msra.mxu0 0
    %211 = vmatprep.mubr.bf16.mxu0 0
    %212 = vmatmul.mubr.bf16.gmra.mrb[0].mxu0 %v132
    %v213 = vpop.f32.mrb[0].mxu0
    %v214 = vadd.f32 %v122, %v213
    %v215 = vpop.f32.mrb[0].mxu0
    %v216 = vpop.f32.mrb[0].mxu0
    %v217 = vadd.f32 %v122, %v216
    %v218 = vpop.f32.mrb[0].mxu0
    %219 = vmatprep.mubr.bf16.mxu0 0
    %220 = vmatmul.mubr.bf16.gmra.mrb[0].mxu0 %v135
    %v221 = vpop.f32.mrb[0].mxu0
    %v222 = vadd.f32 %v122, %v221
    %v223 = vpop.f32.mrb[0].mxu0
    %v224 = vpop.f32.mrb[0].mxu0
    %v225 = vadd.f32 %v122, %v224
    %v226 = vpop.f32.mrb[0].mxu0
    %227 = vmatprep.mubr.bf16.mxu0 0
    %228 = vmatmul.mubr.bf16.gmra.mrb[0].mxu0 %v138
    %v229 = vpop.f32.mrb[0].mxu0
    %v230 = vadd.f32 %v122, %v229
    %v231 = vpop.f32.mrb[0].mxu0
    %v232 = vpop.f32.mrb[0].mxu0
    %v233 = vadd.f32 %v122, %v232
    %v234 = vpop.f32.mrb[0].mxu0
    %235 = vmatprep.mubr.bf16.mxu0 0
    %236 = vmatmul.mubr.bf16.gmra.mrb[0].mxu0 %v141
    %v237 = vpop.f32.mrb[0].mxu0
    %v238 = vadd.f32 %v122, %v237
    %v239 = vpop.f32.mrb[0].mxu0
    %v240 = vpop.f32.mrb[0].mxu0
    %v241 = vadd.f32 %v122, %v240
    %v242 = vpop.f32.mrb[0].mxu0
    %243 = vmatprep.mubr.bf16.mxu0 0
    %244 = vmatmul.mubr.bf16.gmra.mrb[0].mxu0 %v144
    %v245 = vpop.f32.mrb[0].mxu0
    %v246 = vadd.f32 %v122, %v245
    %v247 = vpop.f32.mrb[0].mxu0
    %v248 = vpop.f32.mrb[0].mxu0
    %v249 = vadd.f32 %v122, %v248
    %v250 = vpop.f32.mrb[0].mxu0
    %251 = vmatprep.mubr.bf16.mxu0 0
    %252 = vmatmul.mubr.bf16.gmra.mrb[0].mxu0 %v147
    %v253 = vpop.f32.mrb[0].mxu0
    %v254 = vadd.f32 %v122, %v253
    %v255 = vpop.f32.mrb[0].mxu0
    %v256 = vpop.f32.mrb[0].mxu0
    %v257 = vadd.f32 %v122, %v256
    %v258 = vpop.f32.mrb[0].mxu0
    %259 = vmatprep.mubr.bf16.mxu0 0
    %260 = vmatmul.mubr.bf16.gmra.mrb[0].mxu0 %v150
    %v261 = vpop.f32.mrb[0].mxu0
    %v262 = vadd.f32 %v122, %v261
    %v263 = vpop.f32.mrb[0].mxu0
    %v264 = vpop.f32.mrb[0].mxu0
    %v265 = vadd.f32 %v122, %v264
    %v266 = vpop.f32.mrb[0].mxu0
    %267 = vmatprep.mubr.bf16.mxu0 0
    %268 = vmatmul.mubr.bf16.gmra.mrb[0].mxu0 %v153
    %v269 = vpop.f32.mrb[0].mxu0
    %v270 = vadd.f32 %v122, %v269
    %v271 = vpop.f32.mrb[0].mxu0
    %v272 = vpop.f32.mrb[0].mxu0
    %v273 = vadd.f32 %v122, %v272
    %v274 = vpop.f32.mrb[0].mxu0
    %275 = vmatprep.mubr.bf16.mxu0 0
    %276 = vmatmul.mubr.bf16.gmra.mrb[0].mxu0 %v156
    %v277 = vpop.f32.mrb[0].mxu0
    %v278 = vadd.f32 %v122, %v277
    %v279 = vpop.f32.mrb[0].mxu0
    %v280 = vpop.f32.mrb[0].mxu0
    %v281 = vadd.f32 %v122, %v280
    %v282 = vpop.f32.mrb[0].mxu0
    %283 = vmatprep.mubr.bf16.mxu0 0
    %284 = vmatmul.mubr.bf16.gmra.mrb[0].mxu0 %v159
    %v285 = vpop.f32.mrb[0].mxu0
    %v286 = vadd.f32 %v122, %v285
    %v287 = vpop.f32.mrb[0].mxu0
    %v288 = vpop.f32.mrb[0].mxu0
    %v289 = vadd.f32 %v122, %v288
    %v290 = vpop.f32.mrb[0].mxu0
    %291 = vmatprep.mubr.bf16.mxu0 0
    %292 = vmatmul.mubr.bf16.gmra.mrb[0].mxu0 %v162
    %v293 = vpop.f32.mrb[0].mxu0
    %v294 = vadd.f32 %v122, %v293
    %v295 = vpop.f32.mrb[0].mxu0
    %v296 = vpop.f32.mrb[0].mxu0
    %v297 = vadd.f32 %v122, %v296
    %v298 = vpop.f32.mrb[0].mxu0
    %299 = vmatprep.mubr.bf16.mxu0 0
    %300 = vmatmul.mubr.bf16.gmra.mrb[0].mxu0 %v165
    %v301 = vpop.f32.mrb[0].mxu0
    %v302 = vadd.f32 %v122, %v301
    %v303 = vpop.f32.mrb[0].mxu0
    %v304 = vpop.f32.mrb[0].mxu0
    %v305 = vadd.f32 %v122, %v304
    %v306 = vpop.f32.mrb[0].mxu0
    %307 = vmatprep.mubr.bf16.mxu0 0
    %308 = vmatmul.mubr.bf16.gmra.mrb[0].mxu0 %v168
    %v309 = vpop.f32.mrb[0].mxu0
    %v310 = vadd.f32 %v122, %v309
    %v311 = vpop.f32.mrb[0].mxu0
    %v312 = vpop.f32.mrb[0].mxu0
    %v313 = vadd.f32 %v122, %v312
    %v314 = vpop.f32.mrb[0].mxu0
    %315 = vmatprep.mubr.bf16.mxu0 0
    %316 = vmatmul.mubr.bf16.gmra.mrb[0].mxu0 %v171
    %v317 = vpop.f32.mrb[0].mxu0
    %v318 = vadd.f32 %v122, %v317
    %v319 = vpop.f32.mrb[0].mxu0
    %v320 = vpop.f32.mrb[0].mxu0
    %v321 = vadd.f32 %v122, %v320
    %v322 = vpop.f32.mrb[0].mxu0
    %323 = vmatprep.mubr.bf16.mxu0 0
    %324 = vmatmul.mubr.bf16.gmra.mrb[0].mxu0 %v174
    %v325 = vpop.f32.mrb[0].mxu0
    %v326 = vadd.f32 %v122, %v325
    %v327 = vpop.f32.mrb[0].mxu0
    %v328 = vpop.f32.mrb[0].mxu0
    %v329 = vadd.f32 %v122, %v328
    %v330 = vpop.f32.mrb[0].mxu0
    %331 = vmatprep.mubr.bf16.mxu0 0
    %332 = vmatmul.mubr.bf16.gmra.mrb[0].mxu0 %v177
    %v333 = vpop.f32.mrb[0].mxu0
    %v334 = vadd.f32 %v122, %v333
    %v335 = vpop.f32.mrb[0].mxu0
    %v336 = vpop.f32.mrb[0].mxu0
    %v337 = vadd.f32 %v122, %v336
    %v338 = vpop.f32.mrb[0].mxu0
    %339 = vdwg.mxu0
    %v340 = vadd.f32 %v214, 3.0
    %v341 = vadd.f32 %v217, 3.0
    %v342 = vadd.f32 %v222, 3.0
    %v343 = vadd.f32 %v225, 3.0
    %v344 = vadd.f32 %v230, 3.0
    %v345 = vadd.f32 %v233, 3.0
    %v346 = vadd.f32 %v238, 3.0
    %v347 = vadd.f32 %v241, 3.0
    %v348 = vadd.f32 %v246, 3.0
    %v349 = vadd.f32 %v249, 3.0
    %v350 = vadd.f32 %v254, 3.0
    %v351 = vadd.f32 %v257, 3.0
    %v352 = vadd.f32 %v262, 3.0
    %v353 = vadd.f32 %v265, 3.0
    %v354 = vadd.f32 %v270, 3.0
    %v355 = vadd.f32 %v273, 3.0
    %v356 = vadd.f32 %v278, 3.0
    %v357 = vadd.f32 %v281, 3.0
    %v358 = vadd.f32 %v286, 3.0
    %v359 = vadd.f32 %v289, 3.0
    %v360 = vadd.f32 %v294, 3.0
    %v361 = vadd.f32 %v297, 3.0
    %v362 = vadd.f32 %v302, 3.0
    %v363 = vadd.f32 %v305, 3.0
    %v364 = vadd.f32 %v310, 3.0
    %v365 = vadd.f32 %v313, 3.0
    %v366 = vadd.f32 %v318, 3.0
    %v367 = vadd.f32 %v321, 3.0
    %v368 = vadd.f32 %v326, 3.0
    %v369 = vadd.f32 %v329, 3.0
    %v370 = vadd.f32 %v334, 3.0
    %v371 = vadd.f32 %v337, 3.0
    %v372 = vmax.f32 %v340, 0.0
    %v373 = vmax.f32 %v341, 0.0
    %v374 = vmax.f32 %v342, 0.0
    %v375 = vmax.f32 %v343, 0.0
    %v376 = vmax.f32 %v344, 0.0
    %v377 = vmax.f32 %v345, 0.0
    %v378 = vmax.f32 %v346, 0.0
    %v379 = vmax.f32 %v347, 0.0
    %v380 = vmax.f32 %v348, 0.0
    %v381 = vmax.f32 %v349, 0.0
    %v382 = vmax.f32 %v350, 0.0
    %v383 = vmax.f32 %v351, 0.0
    %v384 = vmax.f32 %v352, 0.0
    %v385 = vmax.f32 %v353, 0.0
    %v386 = vmax.f32 %v354, 0.0
    %v387 = vmax.f32 %v355, 0.0
    %v388 = vmax.f32 %v356, 0.0
    %v389 = vmax.f32 %v357, 0.0
    %v390 = vmax.f32 %v358, 0.0
    %v391 = vmax.f32 %v359, 0.0
    %v392 = vmax.f32 %v360, 0.0
    %v393 = vmax.f32 %v361, 0.0
    %v394 = vmax.f32 %v362, 0.0
    %v395 = vmax.f32 %v363, 0.0
    %v396 = vmax.f32 %v364, 0.0
    %v397 = vmax.f32 %v365, 0.0
    %v398 = vmax.f32 %v366, 0.0
    %v399 = vmax.f32 %v367, 0.0
    %v400 = vmax.f32 %v368, 0.0
    %v401 = vmax.f32 %v369, 0.0
    %v402 = vmax.f32 %v370, 0.0
    %v403 = vmax.f32 %v371, 0.0
    %v404 = vmin.f32 %v372, 6.0
    %v405 = vmin.f32 %v373, 6.0
    %v406 = vmin.f32 %v374, 6.0
    %v407 = vmin.f32 %v375, 6.0
    %v408 = vmin.f32 %v376, 6.0
    %v409 = vmin.f32 %v377, 6.0
    %v410 = vmin.f32 %v378, 6.0
    %v411 = vmin.f32 %v379, 6.0
    %v412 = vmin.f32 %v380, 6.0
    %v413 = vmin.f32 %v381, 6.0
    %v414 = vmin.f32 %v382, 6.0
    %v415 = vmin.f32 %v383, 6.0
    %v416 = vmin.f32 %v384, 6.0
    %v417 = vmin.f32 %v385, 6.0
    %v418 = vmin.f32 %v386, 6.0
    %v419 = vmin.f32 %v387, 6.0
    %v420 = vmin.f32 %v388, 6.0
    %v421 = vmin.f32 %v389, 6.0
    %v422 = vmin.f32 %v390, 6.0
    %v423 = vmin.f32 %v391, 6.0
    %v424 = vmin.f32 %v392, 6.0
    %v425 = vmin.f32 %v393, 6.0
    %v426 = vmin.f32 %v394, 6.0
    %v427 = vmin.f32 %v395, 6.0
    %v428 = vmin.f32 %v396, 6.0
    %v429 = vmin.f32 %v397, 6.0
    %v430 = vmin.f32 %v398, 6.0
    %v431 = vmin.f32 %v399, 6.0
    %v432 = vmin.f32 %v400, 6.0
    %v433 = vmin.f32 %v401, 6.0
    %v434 = vmin.f32 %v402, 6.0
    %v435 = vmin.f32 %v403, 6.0
    %v436 = vmul.f32 %v214, %v404
    %v437 = vmul.f32 %v217, %v405
    %v438 = vmul.f32 %v222, %v406
    %v439 = vmul.f32 %v225, %v407
    %v440 = vmul.f32 %v230, %v408
    %v441 = vmul.f32 %v233, %v409
    %v442 = vmul.f32 %v238, %v410
    %v443 = vmul.f32 %v241, %v411
    %v444 = vmul.f32 %v246, %v412
    %v445 = vmul.f32 %v249, %v413
    %v446 = vmul.f32 %v254, %v414
    %v447 = vmul.f32 %v257, %v415
    %v448 = vmul.f32 %v262, %v416
    %v449 = vmul.f32 %v265, %v417
    %v450 = vmul.f32 %v270, %v418
    %v451 = vmul.f32 %v273, %v419
    %v452 = vmul.f32 %v278, %v420
    %v453 = vmul.f32 %v281, %v421
    %v454 = vmul.f32 %v286, %v422
    %v455 = vmul.f32 %v289, %v423
    %v456 = vmul.f32 %v294, %v424
    %v457 = vmul.f32 %v297, %v425
    %v458 = vmul.f32 %v302, %v426
    %v459 = vmul.f32 %v305, %v427
    %v460 = vmul.f32 %v310, %v428
    %v461 = vmul.f32 %v313, %v429
    %v462 = vmul.f32 %v318, %v430
    %v463 = vmul.f32 %v321, %v431
    %v464 = vmul.f32 %v326, %v432
    %v465 = vmul.f32 %v329, %v433
    %v466 = vmul.f32 %v334, %v434
    %v467 = vmul.f32 %v337, %v435
    %v468 = vmul.f32 %v436, 0.16666667
    %v469 = vmul.f32 %v437, 0.16666667
    %v470 = vmul.f32 %v438, 0.16666667
    %v471 = vmul.f32 %v439, 0.16666667
    %v472 = vmul.f32 %v440, 0.16666667
    %v473 = vmul.f32 %v441, 0.16666667
    %v474 = vmul.f32 %v442, 0.16666667
    %v475 = vmul.f32 %v443, 0.16666667
    %v476 = vmul.f32 %v444, 0.16666667
    %v477 = vmul.f32 %v445, 0.16666667
    %v478 = vmul.f32 %v446, 0.16666667
    %v479 = vmul.f32 %v447, 0.16666667
    %v480 = vmul.f32 %v448, 0.16666667
    %v481 = vmul.f32 %v449, 0.16666667
    %v482 = vmul.f32 %v450, 0.16666667
    %v483 = vmul.f32 %v451, 0.16666667
    %v484 = vmul.f32 %v452, 0.16666667
    %v485 = vmul.f32 %v453, 0.16666667
    %v486 = vmul.f32 %v454, 0.16666667
    %v487 = vmul.f32 %v455, 0.16666667
    %v488 = vmul.f32 %v456, 0.16666667
    %v489 = vmul.f32 %v457, 0.16666667
    %v490 = vmul.f32 %v458, 0.16666667
    %v491 = vmul.f32 %v459, 0.16666667
    %v492 = vmul.f32 %v460, 0.16666667
    %v493 = vmul.f32 %v461, 0.16666667
    %v494 = vmul.f32 %v462, 0.16666667
    %v495 = vmul.f32 %v463, 0.16666667
    %v496 = vmul.f32 %v464, 0.16666667
    %v497 = vmul.f32 %v465, 0.16666667
    %v498 = vmul.f32 %v466, 0.16666667
    %v499 = vmul.f32 %v467, 0.16666667
    %vm500 = vcmask 261120
    %v501 = vsel %vm500, %v468, 0.0
    %v502 = vsel %vm500, %v469, 0.0
    %v503 = vadd.f32 %v501, %v502
    %v504 = vsel %vm500, %v470, 0.0
    %v505 = vadd.f32 %v503, %v504
    %v506 = vsel %vm500, %v471, 0.0
    %v507 = vadd.f32 %v505, %v506
    %v508 = vsel %vm500, %v472, 0.0
    %v509 = vadd.f32 %v507, %v508
    %v510 = vsel %vm500, %v473, 0.0
    %v511 = vadd.f32 %v509, %v510
    %v512 = vsel %vm500, %v474, 0.0
    %v513 = vadd.f32 %v511, %v512
    %v514 = vsel %vm500, %v475, 0.0
    %v515 = vadd.f32 %v513, %v514
    %v516 = vsel %vm500, %v476, 0.0
    %v517 = vadd.f32 %v515, %v516
    %v518 = vsel %vm500, %v477, 0.0
    %v519 = vadd.f32 %v517, %v518
    %v520 = vsel %vm500, %v478, 0.0
    %v521 = vadd.f32 %v519, %v520
    %v522 = vsel %vm500, %v479, 0.0
    %v523 = vadd.f32 %v521, %v522
    %v524 = vsel %vm500, %v480, 0.0
    %v525 = vadd.f32 %v523, %v524
    %v526 = vsel %vm500, %v481, 0.0
    %v527 = vadd.f32 %v525, %v526
    %v528 = vsel %vm500, %v482, 0.0
    %v529 = vadd.f32 %v527, %v528
    %v530 = vsel %vm500, %v483, 0.0
    %v531 = vadd.f32 %v529, %v530
    %v532 = vrot.slane %v531, 4
    %v533 = vadd.f32 %v531, %v532
    %v534 = vrot.slane %v533, 2
    %v535 = vadd.f32 %v533, %v534
    %v536 = vrot.slane %v535, 1
    %v537 = vadd.f32 %v535, %v536
    %v538 = vsel %vm500, %v484, 0.0
    %v539 = vsel %vm500, %v485, 0.0
    %v540 = vadd.f32 %v538, %v539
    %v541 = vsel %vm500, %v486, 0.0
    %v542 = vadd.f32 %v540, %v541
    %v543 = vsel %vm500, %v487, 0.0
    %v544 = vadd.f32 %v542, %v543
    %v545 = vsel %vm500, %v488, 0.0
    %v546 = vadd.f32 %v544, %v545
    %v547 = vsel %vm500, %v489, 0.0
    %v548 = vadd.f32 %v546, %v547
    %v549 = vsel %vm500, %v490, 0.0
    %v550 = vadd.f32 %v548, %v549
    %v551 = vsel %vm500, %v491, 0.0
    %v552 = vadd.f32 %v550, %v551
    %v553 = vsel %vm500, %v492, 0.0
    %v554 = vadd.f32 %v552, %v553
    %v555 = vsel %vm500, %v493, 0.0
    %v556 = vadd.f32 %v554, %v555
    %v557 = vsel %vm500, %v494, 0.0
    %v558 = vadd.f32 %v556, %v557
    %v559 = vsel %vm500, %v495, 0.0
    %v560 = vadd.f32 %v558, %v559
    %v561 = vsel %vm500, %v496, 0.0
    %v562 = vadd.f32 %v560, %v561
    %v563 = vsel %vm500, %v497, 0.0
    %v564 = vadd.f32 %v562, %v563
    %v565 = vsel %vm500, %v498, 0.0
    %v566 = vadd.f32 %v564, %v565
    %v567 = vsel %vm500, %v499, 0.0
    %v568 = vadd.f32 %v566, %v567
    %v569 = vrot.slane %v568, 4
    %v570 = vadd.f32 %v568, %v569
    %v571 = vrot.slane %v570, 2
    %v572 = vadd.f32 %v570, %v571
    %v573 = vrot.slane %v572, 1
    %v574 = vadd.f32 %v572, %v573
    %v575 = vadd.f32 %v117, 3.0
    %v576 = vmax.f32 %v575, 0.0
    %v577 = vmin.f32 %v576, 6.0
    %v578 = vmul.f32 %v117, %v577
    %v579 = vmul.f32 %v578, 0.16666667
    %v580 = vmul.f32 %v579, 79.0
    %v582 = vlaneseq
    %v583 = vshrl.u32 %v582, 7
    %v584 = vsub.s32 0, %v583
    %v585 = vrot.slane %v580, %v584
    %v587 = vsub.f32 %v537, %v585
    %v588 = vsub.f32 %v574, %v585
    %v589 = vmul.f32 %v587, 0.020408163
    %v590 = vmul.f32 %v588, 0.020408163
    %v591 = vpack.c.bf16 %v589, %v589
    %v592 = vpack.c.bf16 %v590, %v590
    %v593 = vld [vmem:[%s3] sm:$0xf]
    %v594 = vld [vmem:[%s3 + $0x4] sm:$0xf]
    %v595 = vld [vmem:[%s3 + $0x8] sm:$0xf]
    %v596 = vld [vmem:[%s3 + $0xc] sm:$0xf]
    %v599 = vunpack.c.l.b16 %v591
    %v600 = vunpack.c.l.b16 %v592
    %v601 = vrot.slane %v600, 7
    %vm602 = vcmask 1041409
    %v603 = vsel %vm602, %v601, %v599
    %v604 = vpack.c.b16 %v603, %v603
    %v609 = vunpack.c.l.b16 %v593
    %v610 = vunpack.c.l.b16 %v594
    %v611 = vunpack.c.l.b16 %v595
    %v612 = vunpack.c.l.b16 %v596
    %v613 = vpack.c.b16 %v610, %v609
    %v614 = vpack.c.b16 %v612, %v611
    %v618 = vsel %vm500, %v604, 0
    %620 = vmatprep.subr.bf16.mxu0 0
    %621 = vmatpush1.bf16.msra.mxu0 %v613
    %622 = vmatprep.subr.bf16.mxu0 0
    %623 = vmatpush1.bf16.msra.mxu0 %v614
    %624 = vmatprep.subr.bf16.mxu0 0
    %625 = vmatpush1.bf16.msra.mxu0 0
    %626 = vmatprep.subr.bf16.mxu0 0
    %627 = vmatpush1.bf16.msra.mxu0 0
    %628 = vmatprep.subr.bf16.mxu0 0
    %629 = vmatpush1.bf16.msra.mxu0 0
    %630 = vmatprep.subr.bf16.mxu0 0
    %631 = vmatpush1.bf16.msra.mxu0 0
    %632 = vmatprep.subr.bf16.mxu0 0
    %633 = vmatpush1.bf16.msra.mxu0 0
    %634 = vmatprep.subr.bf16.mxu0 0
    %635 = vmatpush1.bf16.msra.mxu0 0
    %636 = vmatprep.subr.bf16.mxu0 0
    %637 = vmatpush1.bf16.msra.mxu0 0
    %638 = vmatprep.subr.bf16.mxu0 0
    %639 = vmatpush1.bf16.msra.mxu0 0
    %640 = vmatprep.subr.bf16.mxu0 0
    %641 = vmatpush1.bf16.msra.mxu0 0
    %642 = vmatprep.subr.bf16.mxu0 0
    %643 = vmatpush1.bf16.msra.mxu0 0
    %644 = vmatprep.subr.bf16.mxu0 0
    %645 = vmatpush1.bf16.msra.mxu0 0
    %646 = vmatprep.subr.bf16.mxu0 0
    %647 = vmatpush1.bf16.msra.mxu0 0
    %648 = vmatprep.subr.bf16.mxu0 0
    %649 = vmatpush1.bf16.msra.mxu0 0
    %650 = vmatprep.subr.bf16.mxu0 0
    %651 = vmatpush1.bf16.msra.mxu0 0
    %652 = vmatprep.mubr.bf16.mxu0 0
    %653 = vmatmul.mubr.bf16.gmra.mrb[0].mxu0 %v618
    %v654 = vpop.f32.mrb[0].mxu0
    %v655 = vadd.f32 0.0, %v654
    %v656 = vpop.f32.mrb[0].mxu0
    %v657 = vpop.f32.mrb[0].mxu0
    %v658 = vpop.f32.mrb[0].mxu0
    %659 = vdwg.mxu0
    %vm660 = vcmask 517120
    %v661 = vsel %vm660, %v655, 0.0
    %662 = vadd.xlane.f32.xlu0 %v661
    %v663 = vpop.xlane.xlu0 %662
    %v664 = vrcp.pop 64.0
    %v665 = vmul.f32 %v663, %v664
    %v666 = vsub.f32 %v655, %v665
    %v667 = vmul.f32 %v666, %v666
    %v668 = vsel %vm660, %v667, 0.0
    %669 = vadd.xlane.f32.xlu0 %v668
    %v670 = vpop.xlane.xlu0 %669
    %v671 = vmul.f32 %v670, %v664
    %v672 = vadd.f32 %v671, 1e-05
    %v673 = vrsqrt.pop %v672
    %v674 = vmul.f32 %v666, %v673
    %v675 = vld [vmem:[%s4] sm:$0x1]
    %v677 = vlaneseq
    %v678 = vshrl.u32 %v677, 7
    %v679 = vsub.s32 0, %v678
    %v680 = vrot.slane %v675, %v679
    %v682 = vmul.f32 %v674, %v680
    %v683 = vld [vmem:[%s5] sm:$0x1]
    %v685 = vlaneseq
    %v686 = vshrl.u32 %v685, 7
    %v687 = vsub.s32 0, %v686
    %v688 = vrot.slane %v683, %v687
    %v690 = vadd.f32 %v682, %v688
    %v691 = vadd.f32 %v690, 3.0
    %v692 = vmax.f32 %v691, 0.0
    %v693 = vmin.f32 %v692, 6.0
    %v694 = vmul.f32 %v690, %v693
    %v695 = vmul.f32 %v694, 0.16666667
    %v696 = vpack.c.bf16 %v695, %v695
    %v697 = vld [vmem:[%s6] sm:$0xf]
    %v698 = vld [vmem:[%s6 + $0x4] sm:$0xf]
    %v699 = vld [vmem:[%s6 + $0x8] sm:$0xf]
    %v700 = vld [vmem:[%s6 + $0xc] sm:$0xf]
    %v701 = vld [vmem:[%s6 + $0x10] sm:$0xf]
    %v702 = vld [vmem:[%s6 + $0x14] sm:$0xf]
    %v703 = vld [vmem:[%s6 + $0x18] sm:$0xf]
    %v704 = vld [vmem:[%s6 + $0x1c] sm:$0xf]
    %v705 = vld [vmem:[%s7] sm:$0x1]
    %v707 = vlaneseq
    %v708 = vshrl.u32 %v707, 7
    %v709 = vsub.s32 0, %v708
    %v710 = vrot.slane %v705, %v709
    %v720 = vunpack.c.l.b16 %v697
    %v721 = vunpack.c.l.b16 %v698
    %v722 = vunpack.c.l.b16 %v699
    %v723 = vunpack.c.l.b16 %v700
    %v724 = vunpack.c.l.b16 %v701
    %v725 = vunpack.c.l.b16 %v702
    %v726 = vunpack.c.l.b16 %v703
    %v727 = vunpack.c.l.b16 %v704
    %v728 = vpack.c.b16 %v721, %v720
    %v729 = vpack.c.b16 %v723, %v722
    %v730 = vpack.c.b16 %v725, %v724
    %v731 = vpack.c.b16 %v727, %v726
    %vm736 = vcmask 523264
    %v738 = vsel %vm736, %v696, 0
    %740 = vmatprep.subr.bf16.mxu0 0
    %741 = vmatpush1.bf16.msra.mxu0 %v728
    %742 = vmatprep.subr.bf16.mxu0 0
    %743 = vmatpush1.bf16.msra.mxu0 %v729
    %744 = vmatprep.subr.bf16.mxu0 0
    %745 = vmatpush1.bf16.msra.mxu0 %v730
    %746 = vmatprep.subr.bf16.mxu0 0
    %747 = vmatpush1.bf16.msra.mxu0 %v731
    %748 = vmatprep.subr.bf16.mxu0 0
    %749 = vmatpush1.bf16.msra.mxu0 0
    %750 = vmatprep.subr.bf16.mxu0 0
    %751 = vmatpush1.bf16.msra.mxu0 0
    %752 = vmatprep.subr.bf16.mxu0 0
    %753 = vmatpush1.bf16.msra.mxu0 0
    %754 = vmatprep.subr.bf16.mxu0 0
    %755 = vmatpush1.bf16.msra.mxu0 0
    %756 = vmatprep.subr.bf16.mxu0 0
    %757 = vmatpush1.bf16.msra.mxu0 0
    %758 = vmatprep.subr.bf16.mxu0 0
    %759 = vmatpush1.bf16.msra.mxu0 0
    %760 = vmatprep.subr.bf16.mxu0 0
    %761 = vmatpush1.bf16.msra.mxu0 0
    %762 = vmatprep.subr.bf16.mxu0 0
    %763 = vmatpush1.bf16.msra.mxu0 0
    %764 = vmatprep.subr.bf16.mxu0 0
    %765 = vmatpush1.bf16.msra.mxu0 0
    %766 = vmatprep.subr.bf16.mxu0 0
    %767 = vmatpush1.bf16.msra.mxu0 0
    %768 = vmatprep.subr.bf16.mxu0 0
    %769 = vmatpush1.bf16.msra.mxu0 0
    %770 = vmatprep.subr.bf16.mxu0 0
    %771 = vmatpush1.bf16.msra.mxu0 0
    %772 = vmatprep.mubr.bf16.mxu0 0
    %773 = vmatmul.mubr.bf16.gmra.mrb[0].mxu0 %v738
    %v774 = vpop.f32.mrb[0].mxu0
    %v775 = vadd.f32 %v710, %v774
    %v776 = vpop.f32.mrb[0].mxu0
    %v777 = vpop.f32.mrb[0].mxu0
    %v778 = vpop.f32.mrb[0].mxu0
    %779 = vdwg.mxu0
    %780 = vst [vmem:[#allocation2] sm:$0x3] %v775
    // Predicated region
    $region34: #{efficientvit_cls_forward.1} parent=1 // pred_check
      _
    $region35: #{efficientvit_cls_forward.1} parent=1 // pred_check_branch
      %782 = sbr.rel (0) target = $region37
    $region36: #{efficientvit_cls_forward.1} parent=1 // pred_region
      %s784 = ssub.s32 32, 32
      %785 = vsyncadd [#allocation3], %s784
      %s787 = sshll.u32 [#allocation2], 4
      %s788 = int_to_ptr.vmem [resolvable:$true] %s787
      %790 = dma.vmem_to_hbm [thread:$0]  %s788, 32, %s8, [#allocation3]
    $region37: #{efficientvit_cls_forward.1} parent=1 // pred_fallthru
      _
    // Predicated region
    $region38: #{efficientvit_cls_forward.1} parent=1 // pred_check
      _
    $region39: #{efficientvit_cls_forward.1} parent=1 // pred_check_branch
      %792 = sbr.rel (0) target = $region41
    $region40: #{efficientvit_cls_forward.1} parent=1 // pred_region
      %793 = dma.done [#allocation3], 32
    $region41: #{efficientvit_cls_forward.1} parent=1 // pred_fallthru
      _
    %794 = vsyncpa [#allocation3], 1

</llo_original>
